<compile_context>
chip_gen: v5e
topology: v5e:2x2
jax: 0.10.0
libtpu: 0.0.40
codegen_flags: <defaults>
</compile_context>

<pallas_src>
import jax
import jax.numpy as jnp
from jax.experimental import pallas as pl
from jax.experimental.pallas import tpu as pltpu

GAMMA = 1.5
ALPHA = 0.25

LANES = 128
SUBLANES = 8
MAX_TILE_ROWS = 2048   # (2048,128) f32 tile = 1 MiB per input buffer
NCORES = 2             # leading parallel axis (v7x megacore; no-op elsewhere)


def _focal_loss_kernel(pred_ref, true_ref, w_ref, out_ref):
    j = pl.program_id(1)  # reduction ("arbitrary") axis

    @pl.when(j == 0)
    def _():
        out_ref[...] = jnp.zeros_like(out_ref)

    x = pred_ref[...].astype(jnp.float32)
    z = true_ref[...].astype(jnp.float32)
    w = w_ref[...].astype(jnp.float32)

    # Shared exp(-|x|) feeds both the stable BCE log-term and the sigmoid.
    e = jnp.exp(-jnp.abs(x))

    # Numerically stable BCE-with-logits (reduction='none'):
    #   loss = max(x, 0) - x*z + log(1 + exp(-|x|))
    bce = jnp.maximum(x, 0.0) - x * z + jnp.log1p(e)

    # sigmoid(|x|) = 1 / (1 + exp(-|x|));  sigmoid(x) via sign select.
    sig_abs = pl.reciprocal(1.0 + e, approx=True)
    pred_prob = jnp.where(x >= 0.0, sig_abs, 1.0 - sig_abs)

    p_t = z * pred_prob + (1.0 - z) * (1.0 - pred_prob)
    alpha_factor = z * ALPHA + (1.0 - z) * (1.0 - ALPHA)
    m = 1.0 - p_t
    modulating_factor = m * jnp.sqrt(m)          # m ** 1.5 without pow

    loss = bce * (alpha_factor * modulating_factor * w)

    # Elementwise vreg accumulation: (TILE_ROWS,128) -> (TILE_ROWS/8,8,128),
    # summed over the leading axis (pure VPU adds into the resident output).
    out_ref[...] += loss.reshape(-1, SUBLANES, LANES).sum(axis=0)


def focal_loss_a(pred, true, wadaarsw):
    """pred/true/wadaarsw: same shape (e.g. NCHW). Returns scalar mean focal loss."""
    n_elem = pred.size

    pred_f = pred.reshape(-1)
    true_f = true.reshape(-1)
    w_f = wadaarsw.reshape(-1)

    rows = -(-n_elem // LANES)
    # Biggest tile (multiple of 8 rows) up to MAX_TILE_ROWS.
    tile_rows = min(MAX_TILE_ROWS, -(-rows // SUBLANES) * SUBLANES)
    rows_per_step = NCORES * tile_rows
    rows_padded = -(-rows // rows_per_step) * rows_per_step

    pad = rows_padded * LANES - n_elem
    if pad:
        # Zero weight on the padding -> zero loss contribution; the mean below
        # divides by the true n_elem, so the result is exact.
        pred_f = jnp.pad(pred_f, (0, pad))
        true_f = jnp.pad(true_f, (0, pad))
        w_f = jnp.pad(w_f, (0, pad))

    pred2 = pred_f.reshape(rows_padded, LANES)
    true2 = true_f.reshape(rows_padded, LANES)
    w2 = w_f.reshape(rows_padded, LANES)

    tiles_per_core = rows_padded // rows_per_step

    in_spec = pl.BlockSpec(
        (tile_rows, LANES), lambda c, j: (c * tiles_per_core + j, 0))
    # One (8,128) partial-sum block per core, resident across the j axis.
    out_spec = pl.BlockSpec((SUBLANES, LANES), lambda c, j: (c, 0))

    partial = pl.pallas_call(
        _focal_loss_kernel,
        out_shape=jax.ShapeDtypeStruct((NCORES * SUBLANES, LANES), jnp.float32),
        grid_spec=pltpu.PrefetchScalarGridSpec(
            num_scalar_prefetch=0,
            grid=(NCORES, tiles_per_core),
            in_specs=[in_spec, in_spec, in_spec],
            out_specs=out_spec,
        ),
        compiler_params=pltpu.CompilerParams(
            dimension_semantics=("parallel", "arbitrary"),
        ),
    )(pred2, true2, w2)

    # Tiny final reduction + mean normalisation (divide by the true count).
    return jnp.sum(partial) / n_elem


def focal_loss_a_ref(pred, true, wadaarsw):
    x = pred.astype(jnp.float32)
    z = true.astype(jnp.float32)
    w = wadaarsw.astype(jnp.float32)
    bce = jnp.maximum(x, 0.0) - x * z + jnp.log1p(jnp.exp(-jnp.abs(x)))
    p = jax.nn.sigmoid(x)
    p_t = z * p + (1.0 - z) * (1.0 - p)
    alpha_factor = z * ALPHA + (1.0 - z) * (1.0 - ALPHA)
    mod = (1.0 - p_t) ** GAMMA
    return jnp.mean(bce * alpha_factor * mod * w)


if __name__ == "__main__":
    key = jax.random.PRNGKey(0)
    k1, k2, k3 = jax.random.split(key, 3)
    # NCHW inputs consistent with a detection-head loss: (batch=2, ch=4, 16, 16)
    shape = (2, 4, 16, 16)
    pred = jax.random.normal(k1, shape, dtype=jnp.float32)
    true = (jax.random.uniform(k2, shape) > 0.7).astype(jnp.float32)
    wadaarsw = jax.random.uniform(k3, shape, dtype=jnp.float32) + 0.5

    out = focal_loss_a(pred, true, wadaarsw)
    jax.block_until_ready(out)

    ref = focal_loss_a_ref(pred, true, wadaarsw)
    # Tolerance accounts for the approx EUP reciprocal in the in-kernel sigmoid.
    assert jnp.allclose(out, ref, rtol=1e-3, atol=1e-6), (out, ref)
    print("KERNEL_OK")
</pallas_src>

<mosaic_0001>
module attributes {stable_mosaic.version = 11 : i64} {
  func.func @_focal_loss_kernel(%arg0: i32, %arg1: i32, %arg2: memref<16x128xf32, #tpu.memory_space<vmem>>, %arg3: memref<16x128xf32, #tpu.memory_space<vmem>>, %arg4: memref<16x128xf32, #tpu.memory_space<vmem>>, %arg5: memref<8x128xf32, #tpu.memory_space<vmem>>) attributes {dimension_semantics = [#tpu.dimension_semantics<parallel>, #tpu.dimension_semantics<arbitrary>], iteration_bounds = array<i64: 2, 1>, scalar_prefetch = 0 : i64, scratch_operands = 0 : i64, tpu.core_type = #tpu.core_type<tc>, window_params = [{transform_indices = @transform_0, window_bounds = array<i64: 16, 128>}, {transform_indices = @transform_1, window_bounds = array<i64: 16, 128>}, {transform_indices = @transform_2, window_bounds = array<i64: 16, 128>}, {transform_indices = @transform_3, window_bounds = array<i64: 8, 128>}]} {
    %c0_i32 = arith.constant 0 : i32
    %0 = arith.cmpi eq, %arg1, %c0_i32 : i32
    %1 = arith.extui %0 : i1 to i32
    %c0_i32_0 = arith.constant 0 : i32
    %2 = arith.cmpi ne, %1, %c0_i32_0 : i32
    scf.if %2 {
      %cst_21 = arith.constant 0.000000e+00 : f32
      %50 = vector.broadcast %cst_21 : f32 to vector<8x128xf32>
      %c0_22 = arith.constant 0 : index
      %c0_23 = arith.constant 0 : index
      %51 = vector.load %arg5[%c0_22, %c0_23] : memref<8x128xf32, #tpu.memory_space<vmem>>, vector<8x128xf32>
      tpu.vector_store %arg5[%c0_22, %c0_23], %50 {strides = array<i32>} : memref<8x128xf32, #tpu.memory_space<vmem>>, vector<8x128xf32>,
    } else {
    }
    %c0 = arith.constant 0 : index
    %c0_1 = arith.constant 0 : index
    %3 = vector.load %arg2[%c0, %c0_1] : memref<16x128xf32, #tpu.memory_space<vmem>>, vector<16x128xf32>
    %c0_2 = arith.constant 0 : index
    %c0_3 = arith.constant 0 : index
    %4 = vector.load %arg3[%c0_2, %c0_3] : memref<16x128xf32, #tpu.memory_space<vmem>>, vector<16x128xf32>
    %c0_4 = arith.constant 0 : index
    %c0_5 = arith.constant 0 : index
    %5 = vector.load %arg4[%c0_4, %c0_5] : memref<16x128xf32, #tpu.memory_space<vmem>>, vector<16x128xf32>
    %6 = math.absf %3 : vector<16x128xf32>
    %cst = arith.constant 0.000000e+00 : f32
    %7 = vector.broadcast %cst : f32 to vector<16x128xf32>
    %8 = arith.subf %7, %6 : vector<16x128xf32>
    %9 = math.exp %8 : vector<16x128xf32>
    %cst_6 = arith.constant 0.000000e+00 : f32
    %10 = vector.broadcast %cst_6 : f32 to vector<16x128xf32>
    %11 = arith.maximumf %3, %10 : vector<16x128xf32>
    %12 = arith.mulf %3, %4 : vector<16x128xf32>
    %13 = arith.subf %11, %12 : vector<16x128xf32>
    %14 = math.log1p %9 : vector<16x128xf32>
    %15 = arith.addf %13, %14 : vector<16x128xf32>
    %cst_7 = arith.constant 1.000000e+00 : f32
    %16 = vector.broadcast %cst_7 : f32 to vector<16x128xf32>
    %17 = arith.addf %16, %9 : vector<16x128xf32>
    %18 = tpu.reciprocal %17 {approx = true} : vector<16x128xf32> -> vector<16x128xf32>
    %cst_8 = arith.constant 0.000000e+00 : f32
    %19 = vector.broadcast %cst_8 : f32 to vector<16x128xf32>
    %20 = arith.cmpf oge, %3, %19 : vector<16x128xf32>
    %cst_9 = arith.constant 1.000000e+00 : f32
    %21 = vector.broadcast %cst_9 : f32 to vector<16x128xf32>
    %22 = arith.subf %21, %18 : vector<16x128xf32>
    %23 = arith.select %20, %18, %22 : vector<16x128xi1>, vector<16x128xf32>
    %24 = arith.mulf %4, %23 : vector<16x128xf32>
    %cst_10 = arith.constant 1.000000e+00 : f32
    %25 = vector.broadcast %cst_10 : f32 to vector<16x128xf32>
    %26 = arith.subf %25, %4 : vector<16x128xf32>
    %cst_11 = arith.constant 1.000000e+00 : f32
    %27 = vector.broadcast %cst_11 : f32 to vector<16x128xf32>
    %28 = arith.subf %27, %23 : vector<16x128xf32>
    %29 = arith.mulf %26, %28 : vector<16x128xf32>
    %30 = arith.addf %24, %29 : vector<16x128xf32>
    %cst_12 = arith.constant 2.500000e-01 : f32
    %31 = vector.broadcast %cst_12 : f32 to vector<16x128xf32>
    %32 = arith.mulf %4, %31 : vector<16x128xf32>
    %cst_13 = arith.constant 1.000000e+00 : f32
    %33 = vector.broadcast %cst_13 : f32 to vector<16x128xf32>
    %34 = arith.subf %33, %4 : vector<16x128xf32>
    %cst_14 = arith.constant 7.500000e-01 : f32
    %35 = vector.broadcast %cst_14 : f32 to vector<16x128xf32>
    %36 = arith.mulf %34, %35 : vector<16x128xf32>
    %37 = arith.addf %32, %36 : vector<16x128xf32>
    %cst_15 = arith.constant 1.000000e+00 : f32
    %38 = vector.broadcast %cst_15 : f32 to vector<16x128xf32>
    %39 = arith.subf %38, %30 : vector<16x128xf32>
    %40 = math.sqrt %39 : vector<16x128xf32>
    %41 = arith.mulf %39, %40 : vector<16x128xf32>
    %42 = arith.mulf %37, %41 : vector<16x128xf32>
    %43 = arith.mulf %42, %5 : vector<16x128xf32>
    %44 = arith.mulf %15, %43 : vector<16x128xf32>
    %c0_16 = arith.constant 0 : index
    %c0_17 = arith.constant 0 : index
    %45 = vector.load %arg5[%c0_16, %c0_17] : memref<8x128xf32, #tpu.memory_space<vmem>>, vector<8x128xf32>
    %46 = vector.shape_cast %44 : vector<16x128xf32> to vector<2x8x128xf32>
    %cst_18 = arith.constant dense<0.000000e+00> : vector<8x128xf32>
    %47 = vector.multi_reduction <add>, %46, %cst_18 [0] : vector<2x8x128xf32> to vector<8x128xf32>
    %48 = arith.addf %45, %47 : vector<8x128xf32>
    %c0_19 = arith.constant 0 : index
    %c0_20 = arith.constant 0 : index
    %49 = vector.load %arg5[%c0_19, %c0_20] : memref<8x128xf32, #tpu.memory_space<vmem>>, vector<8x128xf32>
    tpu.vector_store %arg5[%c0_19, %c0_20], %48 {strides = array<i32>} : memref<8x128xf32, #tpu.memory_space<vmem>>, vector<8x128xf32>,
    return
  }
  func.func @transform_0(%arg0: i32, %arg1: i32) -> (i32, i32) {
    %c1_i32 = arith.constant 1 : i32
    %0 = arith.muli %arg0, %c1_i32 : i32
    %1 = arith.addi %0, %arg1 : i32
    %c0_i32 = arith.constant 0 : i32
    %c0_i32_0 = arith.constant 0 : i32
    return %1, %c0_i32 : i32, i32
  }
  func.func @transform_1(%arg0: i32, %arg1: i32) -> (i32, i32) {
    %c1_i32 = arith.constant 1 : i32
    %0 = arith.muli %arg0, %c1_i32 : i32
    %1 = arith.addi %0, %arg1 : i32
    %c0_i32 = arith.constant 0 : i32
    %c0_i32_0 = arith.constant 0 : i32
    return %1, %c0_i32 : i32, i32
  }
  func.func @transform_2(%arg0: i32, %arg1: i32) -> (i32, i32) {
    %c1_i32 = arith.constant 1 : i32
    %0 = arith.muli %arg0, %c1_i32 : i32
    %1 = arith.addi %0, %arg1 : i32
    %c0_i32 = arith.constant 0 : i32
    %c0_i32_0 = arith.constant 0 : i32
    return %1, %c0_i32 : i32, i32
  }
  func.func @transform_3(%arg0: i32, %arg1: i32) -> (i32, i32) {
    %c0_i32 = arith.constant 0 : i32
    %c0_i32_0 = arith.constant 0 : i32
    return %arg0, %c0_i32 : i32, i32
  }
}

</mosaic_0001>

<llo_original>
// kernel: tpu_custom_call.1
$region0: #{tpu_custom_call.1}
  #allocation0 [shape = 'u32[]', space=smem, size = 0x4, offset = 0x4, fixed_abs, tag = 'smem constant byte address 0x4 - core index']
  #allocation1 [shape = 'u32[72,128]{1,0:T(1,128)}', space=vmem, size = 0x9000, scoped, tag = 'internal scratch']
  %s0 = inlined_call_operand.hbm [shape: f32[32,128], index: 0, kind: input, shape index: {}]
  %s1 = inlined_call_operand.hbm [shape: f32[32,128], index: 1, kind: input, shape index: {}]
  %s2 = inlined_call_operand.hbm [shape: f32[32,128], index: 2, kind: input, shape index: {}]
  %s3 = inlined_call_operand.hbm [shape: f32[16,128], index: 3, kind: output, shape index: {}]
  %s4 = sld [smem:[#allocation0]]
  $region61: #{tpu_custom_call.1} parent=0
    _
  %s6 = ssub.s32 1, %s4
  %s7 = scalar_select 0, %s6, %s4
  $region1: #{tpu_custom_call.1} parent=0
    #allocation2 [shape = 'u8[16384]{0}', space=vmem, size = 0x4000, scoped, tag = 'input window, operand 0']
    #allocation3 [shape = 's32[2]{0}', space=sflag, size = 0x8, scoped, tag = 'scoped memory for tpu_custom_call.1']
    #allocation4 [shape = 's32[2]{0}', space=sflag, size = 0x8, scoped, tag = 'scoped memory for tpu_custom_call.1']
    #allocation5 [shape = 'u8[16384]{0}', space=vmem, size = 0x4000, scoped, tag = 'input window, operand 1']
    #allocation6 [shape = 's32[2]{0}', space=sflag, size = 0x8, scoped, tag = 'scoped memory for tpu_custom_call.1']
    #allocation7 [shape = 'u8[16384]{0}', space=vmem, size = 0x4000, scoped, tag = 'input window, operand 2']
    #allocation8 [shape = 'u8[8192]{0}', space=vmem, size = 0x2000, scoped, tag = 'output window, operand 0']
    %8 = vsyncpa [#allocation3], 0
    %s9 = scalar_lea.sflag [#allocation3], 1
    %10 = vsyncpa %s9, 0
    %11 = vsyncpa [#allocation6], 0
    %s12 = scalar_lea.sflag [#allocation6], 1
    %13 = vsyncpa %s12, 0
    %14 = vsyncpa [#allocation4], 0
    %s15 = scalar_lea.sflag [#allocation4], 1
    %16 = vsyncpa %s15, 0
    loop: start=0, step=1, limit=4
    $region2: #{tpu_custom_call.1} parent=1 // loop_pre_header
      _
    $region3: #{tpu_custom_call.1} parent=1 // loop_header
      %s18 = sphi 0, %s22
      %p19 = scmp.ge.s32.totalorder %s18, 4
      %s25 = sphi 0, %s37
      %s26 = sphi 0, %s33
      %s27 = sphi 0, %s25
      %s28 = sphi 0, %s26
      %s29 = sphi 0, %s27
      %s30 = sphi 0, %s28
      %s42 = sphi 0, %s44
      %s45 = sphi 0, %s42
      %s46 = sphi 0, %s45
      %s62 = sphi 0, %s46
      %s70 = sphi 0, %s72
      %s73 = sphi 0, %s70
      %s74 = sphi 0, %s73
      %s90 = sphi 0, %s74
      %s98 = sphi 0, %s100
      %s101 = sphi 0, %s98
      %s102 = sphi 0, %s101
      %s118 = sphi 0, %s102
      %s124 = sphi 0, %s126
      %s127 = sphi 0, %s124
      %s128 = sphi 0, %s127
      %s144 = sphi 0, %s128
    $region4: #{tpu_custom_call.1} parent=1 // loop_header_branch
      %21 = sbr.rel (%p19) target = $region8
    $region5: #{tpu_custom_call.1} parent=1 // loop_body
      %s23 = ssub.s32 %s18, 1
      %s24 = ssub.s32 %s18, 2
      %s31 = sadd.s32 1, %s26
      %p32 = scmp.ge.s32.totalorder %s31, 1
      %s33 = scalar_select %p32, 0, %s31
      %s34 = sadd.s32 1, %s25
      %s35 = scalar_select %p32, %s34, %s25
      %p36 = scmp.ge.s32.totalorder %s35, 2
      %s37 = scalar_select %p36, 0, %s35
      %s38 = sadd.s32 %s25, %s26
      %s39 = sadd.s32 %s37, %s33
      %s40 = ssub.s32 %s38, %s39
      %p41 = scmp.eq.s32.totalorder %s40, 0
      %s43 = sadd.s32 %s42, 1
      %s44 = scalar_select %p41, %s42, %s43
      %p47 = pneg %p41
      %p48 = scmp.eq.s32.totalorder %s18, 1
      %p49 = por %p47, %p48
      %p50 = scmp.ne.s32.totalorder %s42, %s45
      %p51 = scmp.eq.s32.totalorder %s18, 0
      %p52 = por %p50, %p51
      %p53 = scmp.ne.s32.totalorder %s42, %s45
      %p54 = scmp.eq.s32.totalorder %s23, 1
      %p55 = por %p53, %p54
      %p56 = scmp.ne.s32.totalorder %s45, %s46
      %p57 = scmp.eq.s32.totalorder %s23, 0
      %p58 = por %p56, %p57
      %p59 = scmp.ne.s32.totalorder %s45, %s46
      %p60 = scmp.eq.s32.totalorder %s24, 1
      %p61 = por %p59, %p60
      %p63 = scmp.ne.s32.totalorder %s46, %s62
      %p64 = scmp.eq.s32.totalorder %s24, 0
      %p65 = por %p63, %p64
      %s66 = sadd.s32 %s25, %s26
      %s67 = sadd.s32 %s37, %s33
      %s68 = ssub.s32 %s66, %s67
      %p69 = scmp.eq.s32.totalorder %s68, 0
      %s71 = sadd.s32 %s70, 1
      %s72 = scalar_select %p69, %s70, %s71
      %p75 = pneg %p69
      %p76 = scmp.eq.s32.totalorder %s18, 1
      %p77 = por %p75, %p76
      %p78 = scmp.ne.s32.totalorder %s70, %s73
      %p79 = scmp.eq.s32.totalorder %s18, 0
      %p80 = por %p78, %p79
      %p81 = scmp.ne.s32.totalorder %s70, %s73
      %p82 = scmp.eq.s32.totalorder %s23, 1
      %p83 = por %p81, %p82
      %p84 = scmp.ne.s32.totalorder %s73, %s74
      %p85 = scmp.eq.s32.totalorder %s23, 0
      %p86 = por %p84, %p85
      %p87 = scmp.ne.s32.totalorder %s73, %s74
      %p88 = scmp.eq.s32.totalorder %s24, 1
      %p89 = por %p87, %p88
      %p91 = scmp.ne.s32.totalorder %s74, %s90
      %p92 = scmp.eq.s32.totalorder %s24, 0
      %p93 = por %p91, %p92
      %s94 = sadd.s32 %s25, %s26
      %s95 = sadd.s32 %s37, %s33
      %s96 = ssub.s32 %s94, %s95
      %p97 = scmp.eq.s32.totalorder %s96, 0
      %s99 = sadd.s32 %s98, 1
      %s100 = scalar_select %p97, %s98, %s99
      %p103 = pneg %p97
      %p104 = scmp.eq.s32.totalorder %s18, 1
      %p105 = por %p103, %p104
      %p106 = scmp.ne.s32.totalorder %s98, %s101
      %p107 = scmp.eq.s32.totalorder %s18, 0
      %p108 = por %p106, %p107
      %p109 = scmp.ne.s32.totalorder %s98, %s101
      %p110 = scmp.eq.s32.totalorder %s23, 1
      %p111 = por %p109, %p110
      %p112 = scmp.ne.s32.totalorder %s101, %s102
      %p113 = scmp.eq.s32.totalorder %s23, 0
      %p114 = por %p112, %p113
      %p115 = scmp.ne.s32.totalorder %s101, %s102
      %p116 = scmp.eq.s32.totalorder %s24, 1
      %p117 = por %p115, %p116
      %p119 = scmp.ne.s32.totalorder %s102, %s118
      %p120 = scmp.eq.s32.totalorder %s24, 0
      %p121 = por %p119, %p120
      %s122 = ssub.s32 %s25, %s37
      %p123 = scmp.eq.s32.totalorder %s122, 0
      %s125 = sadd.s32 %s124, 1
      %s126 = scalar_select %p123, %s124, %s125
      %p129 = pneg %p123
      %p130 = scmp.eq.s32.totalorder %s18, 1
      %p131 = por %p129, %p130
      %p132 = scmp.ne.s32.totalorder %s124, %s127
      %p133 = scmp.eq.s32.totalorder %s18, 0
      %p134 = por %p132, %p133
      %p135 = scmp.ne.s32.totalorder %s124, %s127
      %p136 = scmp.eq.s32.totalorder %s23, 1
      %p137 = por %p135, %p136
      %p138 = scmp.ne.s32.totalorder %s127, %s128
      %p139 = scmp.eq.s32.totalorder %s23, 0
      %p140 = por %p138, %p139
      %p141 = scmp.ne.s32.totalorder %s127, %s128
      %p142 = scmp.eq.s32.totalorder %s24, 1
      %p143 = por %p141, %p142
      %p145 = scmp.ne.s32.totalorder %s128, %s144
      %p146 = scmp.eq.s32.totalorder %s24, 0
      %p147 = por %p145, %p146
      %p148 = scmp.le.s32.totalorder 1, %s18
      %p149 = scmp.lt.s32.totalorder %s18, 3
      %p150 = pnand %p148, %p149
      %p151 = pneg %p150
      // Predicated region
      $region9: #{tpu_custom_call.1} parent=5 // pred_check
        _
      $region10: #{tpu_custom_call.1} parent=5 // pred_check_branch
        %153 = sbr.rel (%p150) target = $region12
      $region11: #{tpu_custom_call.1} parent=5 // pred_region
        %s154 = ssub.s32 %s18, 1
      $region12: #{tpu_custom_call.1} parent=5 // pred_fallthru
        _
      %p155 = scmp.lt.s32.totalorder %s18, 2
      // Predicated region
      $region13: #{tpu_custom_call.1} parent=5 // pred_check
        %p156 = pneg %p155
      $region14: #{tpu_custom_call.1} parent=5 // pred_check_branch
        %158 = sbr.rel (%p156) target = $region16
      $region15: #{tpu_custom_call.1} parent=5 // pred_region
        // Predicated region
        $region17: #{tpu_custom_call.1} parent=15 // pred_check
          %p159 = pneg %p52
        $region18: #{tpu_custom_call.1} parent=15 // pred_check_branch
          %161 = sbr.rel (%p159) target = $region20
        $region19: #{tpu_custom_call.1} parent=15 // pred_region
          %s162 = sand.u32 %s42, 1
          %s163 = scalar_lea.sflag [#allocation3], %s162
          %s164 = sand.u32 %s42, 1
          %s165 = smul.addr %s164, 16
          %s166 = scalar_lea.vmem [#allocation2], %s165
          %s167 = sadd.s32 %s25, %s26
          %s168 = smul.u32 2, %s167
          %170 = vsyncadd %s163, 0
          %s171 = smul.addr %s168, 8
          %s172 = scalar_lea.hbm %s0, %s171
          %s173 = sshll.u32 %s172, 4
          %s174 = int_to_ptr.hbm [resolvable:$true] %s173
          %s175 = sshll.u32 %s166, 4
          %s176 = int_to_ptr.vmem [resolvable:$true] %s175
          %181 = dma.hbm_to_vmem [thread:$0]  %s174, 256, %s176, %s163, 128, 128, 8
        $region20: #{tpu_custom_call.1} parent=15 // pred_fallthru
          _
        // Predicated region
        $region21: #{tpu_custom_call.1} parent=15 // pred_check
          %p182 = pneg %p80
        $region22: #{tpu_custom_call.1} parent=15 // pred_check_branch
          %184 = sbr.rel (%p182) target = $region24
        $region23: #{tpu_custom_call.1} parent=15 // pred_region
          %s185 = sand.u32 %s18, 1
          %s186 = scalar_lea.sflag [#allocation6], %s185
          %s187 = sand.u32 %s70, 1
          %s188 = smul.addr %s187, 16
          %s189 = scalar_lea.vmem [#allocation5], %s188
          %s190 = sadd.s32 %s25, %s26
          %s191 = smul.u32 2, %s190
          %193 = vsyncadd %s186, 0
          %s194 = smul.addr %s191, 8
          %s195 = scalar_lea.hbm %s1, %s194
          %s196 = sshll.u32 %s195, 4
          %s197 = int_to_ptr.hbm [resolvable:$true] %s196
          %s198 = sshll.u32 %s189, 4
          %s199 = int_to_ptr.vmem [resolvable:$true] %s198
          %204 = dma.hbm_to_vmem [thread:$0]  %s197, 256, %s199, %s186, 128, 128, 8
        $region24: #{tpu_custom_call.1} parent=15 // pred_fallthru
          _
        // Predicated region
        $region25: #{tpu_custom_call.1} parent=15 // pred_check
          %p205 = pneg %p108
        $region26: #{tpu_custom_call.1} parent=15 // pred_check_branch
          %207 = sbr.rel (%p205) target = $region28
        $region27: #{tpu_custom_call.1} parent=15 // pred_region
          %s208 = sand.u32 %s18, 1
          %s209 = scalar_lea.sflag [#allocation6], %s208
          %s210 = sand.u32 %s98, 1
          %s211 = smul.addr %s210, 16
          %s212 = scalar_lea.vmem [#allocation7], %s211
          %s213 = sadd.s32 %s25, %s26
          %s214 = smul.u32 2, %s213
          %216 = vsyncadd %s209, 0
          %s217 = smul.addr %s214, 8
          %s218 = scalar_lea.hbm %s2, %s217
          %s219 = sshll.u32 %s218, 4
          %s220 = int_to_ptr.hbm [resolvable:$true] %s219
          %s221 = sshll.u32 %s212, 4
          %s222 = int_to_ptr.vmem [resolvable:$true] %s221
          %227 = dma.hbm_to_vmem [thread:$0]  %s220, 256, %s222, %s209, 128, 128, 8
        $region28: #{tpu_custom_call.1} parent=15 // pred_fallthru
          _
      $region16: #{tpu_custom_call.1} parent=5 // pred_fallthru
        _
      %p228 = scmp.le.s32.totalorder 1, %s18
      %p229 = scmp.lt.s32.totalorder %s18, 3
      %p230 = pnand %p228, %p229
      %p231 = pneg %p230
      // Predicated region
      $region29: #{tpu_custom_call.1} parent=5 // pred_check
        _
      $region30: #{tpu_custom_call.1} parent=5 // pred_check_branch
        %233 = sbr.rel (%p230) target = $region32
      $region31: #{tpu_custom_call.1} parent=5 // pred_region
        %s234 = ssub.s32 %s18, 1
        %s235 = sand.u32 %s45, 1
        %s236 = scalar_lea.sflag [#allocation3], %s235
        %s237 = sand.u32 %s45, 1
        %s238 = smul.addr %s237, 16
        %s239 = scalar_lea.vmem [#allocation2], %s238
        // Predicated region
        $region33: #{tpu_custom_call.1} parent=31 // pred_check
          %p240 = pneg %p58
        $region34: #{tpu_custom_call.1} parent=31 // pred_check_branch
          %242 = sbr.rel (%p240) target = $region36
        $region35: #{tpu_custom_call.1} parent=31 // pred_region
          %244 = dma.done %s236, 256
        $region36: #{tpu_custom_call.1} parent=31 // pred_fallthru
          _
        %s245 = sand.u32 %s23, 1
        %s246 = scalar_lea.sflag [#allocation6], %s245
        %s247 = sand.u32 %s73, 1
        %s248 = smul.addr %s247, 16
        %s249 = scalar_lea.vmem [#allocation5], %s248
        // Predicated region
        $region37: #{tpu_custom_call.1} parent=31 // pred_check
          %p250 = pneg %p86
        $region38: #{tpu_custom_call.1} parent=31 // pred_check_branch
          %252 = sbr.rel (%p250) target = $region40
        $region39: #{tpu_custom_call.1} parent=31 // pred_region
          %254 = dma.done %s246, 256
        $region40: #{tpu_custom_call.1} parent=31 // pred_fallthru
          _
        %s255 = sand.u32 %s23, 1
        %s256 = scalar_lea.sflag [#allocation6], %s255
        %s257 = sand.u32 %s101, 1
        %s258 = smul.addr %s257, 16
        %s259 = scalar_lea.vmem [#allocation7], %s258
        // Predicated region
        $region41: #{tpu_custom_call.1} parent=31 // pred_check
          %p260 = pneg %p114
        $region42: #{tpu_custom_call.1} parent=31 // pred_check_branch
          %262 = sbr.rel (%p260) target = $region44
        $region43: #{tpu_custom_call.1} parent=31 // pred_region
          %264 = dma.done %s256, 256
        $region44: #{tpu_custom_call.1} parent=31 // pred_fallthru
          _
        %s265 = sand.u32 %s45, 1
        %s266 = scalar_lea.sflag [#allocation3], %s265
        %s267 = sand.u32 %s45, 1
        %s268 = smul.addr %s267, 16
        %s269 = scalar_lea.vmem [#allocation2], %s268
        %p270 = pneg %p58
        %p271 = pneg %p55
        %s272 = sand.u32 %s23, 1
        %s273 = scalar_lea.sflag [#allocation6], %s272
        %s274 = sand.u32 %s73, 1
        %s275 = smul.addr %s274, 16
        %s276 = scalar_lea.vmem [#allocation5], %s275
        %p277 = pneg %p86
        %p278 = pneg %p83
        %s279 = sand.u32 %s23, 1
        %s280 = scalar_lea.sflag [#allocation6], %s279
        %s281 = sand.u32 %s101, 1
        %s282 = smul.addr %s281, 16
        %s283 = scalar_lea.vmem [#allocation7], %s282
        %p284 = pneg %p114
        %p285 = pneg %p111
        %p286 = pneg %p140
        %p287 = pneg %p137
        %s288 = sand.u32 %s127, 1
        %s289 = scalar_lea.sflag [#allocation4], %s288
        %s290 = sand.u32 %s127, 1
        %s291 = smul.addr %s290, 8
        %s292 = scalar_lea.vmem [#allocation8], %s291
        %s293 = sadd.s32 %s27, %s28
        %s294 = smul.u32 2, %s293
        %s295 = sadd.s32 %s27, %s28
        %s296 = smul.u32 2, %s295
        %s297 = sadd.s32 %s27, %s28
        %s298 = smul.u32 2, %s297
        %p299 = scmp.eq.s32.totalorder %s28, 0
        // Predicated region
        $region45: #{tpu_custom_call.1} parent=31 // pred_check
          %p300 = pneg %p299
        $region46: #{tpu_custom_call.1} parent=31 // pred_check_branch
          %302 = sbr.rel (%p300) target = $region48
        $region47: #{tpu_custom_call.1} parent=31 // pred_region
          %303 = vst [vmem:[%s292] sm:$0xff] 0.0
        $region48: #{tpu_custom_call.1} parent=31 // pred_fallthru
          _
        %v304 = vld [vmem:[%s239] sm:$0xff]
        %v305 = vld [vmem:[%s239 + $0x8] sm:$0xff]
        %v306 = vld [vmem:[%s249] sm:$0xff]
        %v307 = vld [vmem:[%s249 + $0x8] sm:$0xff]
        %v308 = vld [vmem:[%s259] sm:$0xff]
        %v309 = vld [vmem:[%s259 + $0x8] sm:$0xff]
        %v310 = vand.u32 2147483647, %v304
        %v311 = vand.u32 2147483647, %v305
        %v312 = vsub.f32 0.0, %v310
        %v313 = vsub.f32 0.0, %v311
        %v314 = vmul.f32 %v312, 1.442695
        %v315 = vpow.pop %v314
        %v316 = vmul.f32 %v313, 1.442695
        %v317 = vpow.pop %v316
        %v318 = vmax.f32 %v304, 0.0
        %v319 = vmax.f32 %v305, 0.0
        %v320 = vmul.f32 %v304, %v306
        %v321 = vmul.f32 %v305, %v307
        %v322 = vsub.f32 %v318, %v320
        %v323 = vsub.f32 %v319, %v321
        %v324 = vadd.f32 %v315, 1.0
        %v325 = vlog2.pop %v324
        %v326 = vmul.f32 %v325, 0.6931472
        %v327 = vmul.f32 -0.5, %v315
        %v328 = vadd.f32 %v327, 1.0
        %v329 = vmul.f32 %v328, %v315
        %v330 = vand.u32 2147483647, %v315
        %vm331 = vcmp.lt.f32.partialorder %v330, 0.0004427343
        %v332 = vsel %vm331, %v329, %v326
        %v333 = vadd.f32 %v317, 1.0
        %v334 = vlog2.pop %v333
        %v335 = vmul.f32 %v334, 0.6931472
        %v336 = vmul.f32 -0.5, %v317
        %v337 = vadd.f32 %v336, 1.0
        %v338 = vmul.f32 %v337, %v317
        %v339 = vand.u32 2147483647, %v317
        %vm340 = vcmp.lt.f32.partialorder %v339, 0.0004427343
        %v341 = vsel %vm340, %v338, %v335
        %v342 = vadd.f32 %v322, %v332
        %v343 = vadd.f32 %v323, %v341
        %v344 = vadd.f32 %v315, 1.0
        %v345 = vadd.f32 %v317, 1.0
        %v346 = vrcp.pop %v344
        %v347 = vrcp.pop %v345
        %vm348 = vcmp.ge.f32.partialorder %v304, 0.0
        %vm349 = vcmp.ge.f32.partialorder %v305, 0.0
        %v350 = vsub.f32 1.0, %v346
        %v351 = vsub.f32 1.0, %v347
        %v352 = vsel %vm348, %v346, %v350
        %v353 = vsel %vm349, %v347, %v351
        %v354 = vmul.f32 %v306, %v352
        %v355 = vmul.f32 %v307, %v353
        %v356 = vsub.f32 1.0, %v306
        %v357 = vsub.f32 1.0, %v307
        %v358 = vsub.f32 1.0, %v352
        %v359 = vsub.f32 1.0, %v353
        %v360 = vmul.f32 %v356, %v358
        %v361 = vmul.f32 %v357, %v359
        %v362 = vadd.f32 %v354, %v360
        %v363 = vadd.f32 %v355, %v361
        %v364 = vmul.f32 %v306, 0.25
        %v365 = vmul.f32 %v307, 0.25
        %v366 = vmul.f32 %v356, 0.75
        %v367 = vmul.f32 %v357, 0.75
        %v368 = vadd.f32 %v364, %v366
        %v369 = vadd.f32 %v365, %v367
        %v370 = vsub.f32 1.0, %v362
        %v371 = vsub.f32 1.0, %v363
        %v372 = vrsqrt.pop %v370
        %v373 = vmul.f32 %v372, %v370
        %v374 = vmul.f32 %v373, %v372
        %v375 = vmul.f32 0.5, %v374
        %v376 = vsub.f32 1.5, %v375
        %v377 = vmul.f32 %v372, %v376
        %v378 = vmul.f32 %v370, %v377
        %vm379 = vcmp.eq.f32.partialorder %v370, inf
        %v380 = vsel %vm379, %v370, %v378
        %vm381 = vcmp.eq.f32.partialorder %v370, 0.0
        %v382 = vand.u32 %v370, 2147483648
        %v383 = vsel %vm381, %v382, %v380
        %v384 = vrsqrt.pop %v371
        %v385 = vmul.f32 %v384, %v371
        %v386 = vmul.f32 %v385, %v384
        %v387 = vmul.f32 0.5, %v386
        %v388 = vsub.f32 1.5, %v387
        %v389 = vmul.f32 %v384, %v388
        %v390 = vmul.f32 %v371, %v389
        %vm391 = vcmp.eq.f32.partialorder %v371, inf
        %v392 = vsel %vm391, %v371, %v390
        %vm393 = vcmp.eq.f32.partialorder %v371, 0.0
        %v394 = vand.u32 %v371, 2147483648
        %v395 = vsel %vm393, %v394, %v392
        %v396 = vmul.f32 %v370, %v383
        %v397 = vmul.f32 %v371, %v395
        %v398 = vmul.f32 %v368, %v396
        %v399 = vmul.f32 %v369, %v397
        %v400 = vmul.f32 %v398, %v308
        %v401 = vmul.f32 %v399, %v309
        %v402 = vmul.f32 %v342, %v400
        %v403 = vmul.f32 %v343, %v401
        %v404 = vld [vmem:[%s292] sm:$0xff]
        %v405 = vadd.f32 %v402, %v403
        %v406 = vadd.f32 %v404, %v405
        %407 = vst [vmem:[%s292] sm:$0xff] %v406
        %s408 = sand.u32 %s127, 1
        %s409 = scalar_lea.sflag [#allocation4], %s408
        %s410 = sand.u32 %s127, 1
        %s411 = smul.addr %s410, 8
        %s412 = scalar_lea.vmem [#allocation8], %s411
        // Predicated region
        $region49: #{tpu_custom_call.1} parent=31 // pred_check
          %p413 = pneg %p137
        $region50: #{tpu_custom_call.1} parent=31 // pred_check_branch
          %415 = sbr.rel (%p413) target = $region52
        $region51: #{tpu_custom_call.1} parent=31 // pred_region
          %417 = vsyncadd %s409, 0
          %s418 = smul.addr %s27, 8
          %s419 = scalar_lea.hbm %s3, %s418
          %s421 = sshll.u32 %s412, 4
          %s422 = int_to_ptr.vmem [resolvable:$true] %s421
          %s423 = sshll.u32 %s419, 4
          %s424 = int_to_ptr.hbm [resolvable:$true] %s423
          %426 = dma.vmem_to_hbm [thread:$0]  %s422, 128, %s424, %s409
        $region52: #{tpu_custom_call.1} parent=31 // pred_fallthru
          _
      $region32: #{tpu_custom_call.1} parent=5 // pred_fallthru
        _
      %p427 = scmp.le.s32.totalorder 2, %s18
      // Predicated region
      $region53: #{tpu_custom_call.1} parent=5 // pred_check
        %p428 = pneg %p427
      $region54: #{tpu_custom_call.1} parent=5 // pred_check_branch
        %430 = sbr.rel (%p428) target = $region56
      $region55: #{tpu_custom_call.1} parent=5 // pred_region
        %s431 = ssub.s32 %s18, 2
        // Predicated region
        $region57: #{tpu_custom_call.1} parent=55 // pred_check
          %p432 = pneg %p143
        $region58: #{tpu_custom_call.1} parent=55 // pred_check_branch
          %434 = sbr.rel (%p432) target = $region60
        $region59: #{tpu_custom_call.1} parent=55 // pred_region
          %s435 = sand.u32 %s128, 1
          %s436 = scalar_lea.sflag [#allocation4], %s435
          %s437 = sand.u32 %s128, 1
          %s438 = smul.addr %s437, 8
          %s439 = scalar_lea.vmem [#allocation8], %s438
          %441 = dma.done %s436, 128
        $region60: #{tpu_custom_call.1} parent=55 // pred_fallthru
          _
      $region56: #{tpu_custom_call.1} parent=5 // pred_fallthru
        _
    $region6: #{tpu_custom_call.1} parent=1 // loop_footer
      %s22 = sadd.s32 1, %s18
    $region7: #{tpu_custom_call.1} parent=1 // loop_footer_branch
      %17 = sbr.rel target = $region3
    $region8: #{tpu_custom_call.1} parent=1 // loop_exit
      _
    %442 = vsyncpa [#allocation3], 1
    %s443 = scalar_lea.sflag [#allocation3], 1
    %444 = vsyncpa %s443, 1
    %445 = vsyncpa [#allocation6], 1
    %s446 = scalar_lea.sflag [#allocation6], 1
    %447 = vsyncpa %s446, 1
    %448 = vsyncpa [#allocation4], 1
    %s449 = scalar_lea.sflag [#allocation4], 1
    %450 = vsyncpa %s449, 1

</llo_original>
